<compile_context>
chip_gen: v5e
topology: v5e:2x2
jax: 0.10.0
libtpu: 0.0.40
codegen_flags: <defaults>
</compile_context>

<pallas_src>
import jax
import jax.numpy as jnp
from jax import lax
from jax.experimental import pallas as pl
from jax.experimental.pallas import tpu as pltpu

HID_SIZE = 256


def critic_kernel(state_ref, goal_ref, act_ref,
                  w1_ref, b1_ref,
                  w2_ref, b2_ref,
                  w3_ref, b3_ref,
                  w4_ref, b4_ref,
                  o_ref,
                  xcat_ref):
    bf16 = jnp.bfloat16
    f32 = jnp.float32

    obs_d = state_ref.shape[1]
    goal_d = goal_ref.shape[1]
    act_d = act_ref.shape[1]

    # Fused concat: three static-slice stores into an f32 VMEM scratch, then a
    # single K=(obs+goal+act) MXU push against the packed W1 (instead of three
    # tiny K=16/8/4 pushes + two full-width VPU adds).
    xcat_ref[:, 0:obs_d] = state_ref[...].astype(f32)
    xcat_ref[:, obs_d:obs_d + goal_d] = goal_ref[...].astype(f32)
    xcat_ref[:, obs_d + goal_d:obs_d + goal_d + act_d] = act_ref[...].astype(f32)
    x = xcat_ref[...].astype(bf16)

    # Layer 1
    h = jnp.dot(x, w1_ref[...], preferred_element_type=f32)
    h = jnp.maximum(h + b1_ref[...], 0.0)

    # Layer 2
    h = jnp.dot(h.astype(bf16), w2_ref[...], preferred_element_type=f32)
    h = jnp.maximum(h + b2_ref[...], 0.0)

    # Layer 3
    h = jnp.dot(h.astype(bf16), w3_ref[...], preferred_element_type=f32)
    h = jnp.maximum(h + b3_ref[...], 0.0)

    # Layer 4 (N=1): w4_row (1, H) contracted against h's last dim on the MXU
    # (transposed-RHS contraction) -> (1, block_batch), already lane-dense for
    # an unmasked store.  Scalar bias comes from SMEM.
    out = lax.dot_general(w4_ref[...], h.astype(bf16),
                          dimension_numbers=(((1,), (1,)), ((), ())),
                          preferred_element_type=f32)
    o_ref[...] = (out + b4_ref[0, 0]).astype(o_ref.dtype)


def _pick_block_batch(batch):
    """Default batch-tile heuristic.

    Large tiles amortize the fixed per-grid-step overhead (the MLP is only
    ~0.3 MFLOP/row, so the kernel is overhead-bound), but whenever the batch
    is big enough we keep >= 2 tiles so both v7x TensorCores get work.  Tiles
    are multiples of 128 (good MXU M-fill on v5e, lane-dense output blocks).
    Oddly-sized batches fall back to a single full-batch tile.
    """
    if batch >= 256 and batch % 128 == 0:
        cap = min(1024, batch // 2)
        for cand in range(cap - (cap % 128), 0, -128):
            if batch % cand == 0:
                return cand
    return batch


def critic_forward(state, goal, action, kparams, *, block_batch=None):
    """Runs the fused Critic forward. `kparams` comes from prepare_params()."""
    batch = state.shape[0]
    obs_d, goal_d, act_d = state.shape[1], goal.shape[1], action.shape[1]
    in_dim = obs_d + goal_d + act_d
    (w1, b1), (w2, b2), (w3, b3), (w4_row, b4) = kparams
    hid = w2.shape[0]
    assert w1.shape == (in_dim, hid)

    if block_batch is None:
        block_batch = _pick_block_batch(batch)
    else:
        assert block_batch == batch or (
            batch % block_batch == 0 and block_batch % 128 == 0), (
            "block_batch must equal batch, or be a multiple of 128 dividing batch")
    grid = (batch // block_batch,)

    batch_map = lambda i: (i, 0)   # batch-tiled inputs
    out_map = lambda i: (0, i)     # lane-dense (1, block_batch) output slab
    const_map = lambda i: (0, 0)   # weights/biases: VMEM-resident across grid

    in_specs = [
        pl.BlockSpec((block_batch, obs_d), batch_map),
        pl.BlockSpec((block_batch, goal_d), batch_map),
        pl.BlockSpec((block_batch, act_d), batch_map),
        pl.BlockSpec((in_dim, hid), const_map),                     # W1 packed
        pl.BlockSpec((1, hid), const_map),                          # b1
        pl.BlockSpec((hid, hid), const_map),                        # W2
        pl.BlockSpec((1, hid), const_map),                          # b2
        pl.BlockSpec((hid, hid), const_map),                        # W3
        pl.BlockSpec((1, hid), const_map),                          # b3
        pl.BlockSpec((1, hid), const_map),                          # w4 row
        pl.BlockSpec(memory_space=pltpu.MemorySpace.SMEM),          # b4 scalar
    ]
    out_specs = pl.BlockSpec((1, block_batch), out_map)

    out_row = pl.pallas_call(
        critic_kernel,
        out_shape=jax.ShapeDtypeStruct((1, batch), jnp.float32),
        grid_spec=pltpu.PrefetchScalarGridSpec(
            num_scalar_prefetch=0,
            grid=grid,
            in_specs=in_specs,
            out_specs=out_specs,
            scratch_shapes=[pltpu.VMEM((block_batch, in_dim), jnp.float32)]),
        compiler_params=pltpu.CompilerParams(
            dimension_semantics=("parallel",)),
    )(state, goal, action, w1, b1, w2, b2, w3, b3, w4_row, b4)

    return out_row.reshape(batch, 1)


def init_linear(key, fan_in, fan_out):
    """nn.Linear-style init. Returns W^T with shape (fan_in, fan_out) so the
    math is x @ W^T, and bias with shape (1, fan_out)."""
    kw, kb = jax.random.split(key)
    bound = 1.0 / jnp.sqrt(jnp.float32(fan_in))
    w = jax.random.uniform(kw, (fan_in, fan_out), jnp.float32, -bound, bound)
    b = jax.random.uniform(kb, (1, fan_out), jnp.float32, -bound, bound)
    return w, b


def prepare_params(fp32_params):
    """One-time conversion: cast weights to bf16 (biases stay f32), transpose
    W4 into a lane-dense (1, H) row, and make the final bias a (1,1) SMEM
    scalar.  W1 stays packed as a single (in_dim, H) matrix; the concat is
    fused in-kernel via a VMEM scratch."""
    (w1, b1), (w2, b2), (w3, b3), (w4, b4) = fp32_params
    bf16, f32 = jnp.bfloat16, jnp.float32
    return ((w1.astype(bf16), b1.astype(f32)),
            (w2.astype(bf16), b2.astype(f32)),
            (w3.astype(bf16), b3.astype(f32)),
            (w4.T.astype(bf16), b4.reshape(1, 1).astype(f32)))


def ref_bf16(state, goal, action, kparams):
    """Pure-JAX reference matching the kernel's bf16-operand / f32-accum math."""
    (w1, b1), (w2, b2), (w3, b3), (w4_row, b4) = kparams
    bf16, f32 = jnp.bfloat16, jnp.float32
    x = jnp.concatenate([state, goal, action], axis=1).astype(bf16)
    h = jnp.dot(x, w1, preferred_element_type=f32)
    h = jnp.maximum(h + b1, 0.0)
    h = jnp.maximum(jnp.dot(h.astype(bf16), w2, preferred_element_type=f32) + b2, 0.0)
    h = jnp.maximum(jnp.dot(h.astype(bf16), w3, preferred_element_type=f32) + b3, 0.0)
    out = jnp.dot(h.astype(bf16), w4_row.T, preferred_element_type=f32)
    return out + b4[0, 0]


def ref_fp32(state, goal, action, fp32_params):
    """Full-f32 reference matching the original PyTorch module semantics."""
    (w1, b1), (w2, b2), (w3, b3), (w4, b4) = fp32_params
    x = jnp.concatenate([state, goal, action], axis=1)
    h = jnp.maximum(x @ w1 + b1, 0.0)
    h = jnp.maximum(h @ w2 + b2, 0.0)
    h = jnp.maximum(h @ w3 + b3, 0.0)
    return h @ w4 + b4


if __name__ == "__main__":
    obs_size, goal_size, act_size = 16, 8, 4
    in_dim = obs_size + goal_size + act_size

    key = jax.random.PRNGKey(0)
    k1, k2, k3, k4, kdata = jax.random.split(key, 5)

    fp32_params = (
        init_linear(k1, in_dim, HID_SIZE),
        init_linear(k2, HID_SIZE, HID_SIZE),
        init_linear(k3, HID_SIZE, HID_SIZE),
        init_linear(k4, HID_SIZE, 1),
    )
    kparams = prepare_params(fp32_params)

    # batch=8 exercises the small / single-tile path; batch=512 exercises the
    # multi-tile grid (block_batch=256, grid=(2,)) and the lane-dense output
    # index map.
    for batch in (8, 512):
        ks, kg, ka, kdata = jax.random.split(kdata, 4)
        state = jax.random.normal(ks, (batch, obs_size), jnp.float32)
        goal = jax.random.normal(kg, (batch, goal_size), jnp.float32)
        action = jax.random.normal(ka, (batch, act_size), jnp.float32)

        out = jax.block_until_ready(critic_forward(state, goal, action, kparams))
        assert out.shape == (batch, 1)

        # Tight check against a reference using the same bf16-operand math.
        ref_b = ref_bf16(state, goal, action, kparams)
        assert jnp.allclose(out, ref_b, atol=1e-2, rtol=1e-2), (batch, out, ref_b)

        # Looser semantic check against the full-f32 PyTorch-equivalent path
        # (bf16 weights/activations introduce ~1% error; acceptable for
        # inference — keep activations f32 if used for TD targets in training).
        ref_f = ref_fp32(state, goal, action, fp32_params)
        assert jnp.allclose(out, ref_f, atol=5e-2), (batch, out, ref_f)

    print("KERNEL_OK")
</pallas_src>

<mosaic_0001>
module attributes {stable_mosaic.version = 11 : i64} {
  func.func @critic_kernel(%arg0: i32, %arg1: memref<8x16xf32, #tpu.memory_space<vmem>>, %arg2: memref<8x8xf32, #tpu.memory_space<vmem>>, %arg3: memref<8x4xf32, #tpu.memory_space<vmem>>, %arg4: memref<28x256xbf16, #tpu.memory_space<vmem>>, %arg5: memref<1x256xf32, #tpu.memory_space<vmem>>, %arg6: memref<256x256xbf16, #tpu.memory_space<vmem>>, %arg7: memref<1x256xf32, #tpu.memory_space<vmem>>, %arg8: memref<256x256xbf16, #tpu.memory_space<vmem>>, %arg9: memref<1x256xf32, #tpu.memory_space<vmem>>, %arg10: memref<1x256xbf16, #tpu.memory_space<vmem>>, %arg11: memref<1x1xf32, #tpu.memory_space<smem>>, %arg12: memref<1x8xf32, #tpu.memory_space<vmem>>, %arg13: memref<8x28xf32, #tpu.memory_space<vmem>>) attributes {dimension_semantics = [#tpu.dimension_semantics<parallel>], iteration_bounds = array<i64: 1>, scalar_prefetch = 0 : i64, scratch_operands = 1 : i64, tpu.core_type = #tpu.core_type<tc>, window_params = [{transform_indices = @transform_0, window_bounds = array<i64: 8, 16>}, {transform_indices = @transform_1, window_bounds = array<i64: 8, 8>}, {transform_indices = @transform_2, window_bounds = array<i64: 8, 4>}, {pipeline_mode = #tpu.pipeline_mode<synchronous>, transform_indices = @transform_3, window_bounds = array<i64: 28, 256>}, {pipeline_mode = #tpu.pipeline_mode<synchronous>, transform_indices = @transform_4, window_bounds = array<i64: 1, 256>}, {pipeline_mode = #tpu.pipeline_mode<synchronous>, transform_indices = @transform_5, window_bounds = array<i64: 256, 256>}, {pipeline_mode = #tpu.pipeline_mode<synchronous>, transform_indices = @transform_6, window_bounds = array<i64: 1, 256>}, {pipeline_mode = #tpu.pipeline_mode<synchronous>, transform_indices = @transform_7, window_bounds = array<i64: 256, 256>}, {pipeline_mode = #tpu.pipeline_mode<synchronous>, transform_indices = @transform_8, window_bounds = array<i64: 1, 256>}, {pipeline_mode = #tpu.pipeline_mode<synchronous>, transform_indices = @transform_9, window_bounds = array<i64: 1, 256>}, {transform_indices = @transform_10, window_bounds = array<i64: 1, 1>}, {transform_indices = @transform_11, window_bounds = array<i64: 1, 8>}]} {
    %c0 = arith.constant 0 : index
    %c0_0 = arith.constant 0 : index
    %0 = vector.load %arg1[%c0, %c0_0] : memref<8x16xf32, #tpu.memory_space<vmem>>, vector<8x16xf32>
    %c0_1 = arith.constant 0 : index
    %c0_2 = arith.constant 0 : index
    %1 = vector.load %arg13[%c0_1, %c0_2] : memref<8x28xf32, #tpu.memory_space<vmem>>, vector<8x16xf32>
    tpu.vector_store %arg13[%c0_1, %c0_2], %0 {strides = array<i32>} : memref<8x28xf32, #tpu.memory_space<vmem>>, vector<8x16xf32>,
    %c0_3 = arith.constant 0 : index
    %c0_4 = arith.constant 0 : index
    %2 = vector.load %arg2[%c0_3, %c0_4] : memref<8x8xf32, #tpu.memory_space<vmem>>, vector<8x8xf32>
    %c0_5 = arith.constant 0 : index
    %c16 = arith.constant 16 : index
    %3 = vector.load %arg13[%c0_5, %c16] : memref<8x28xf32, #tpu.memory_space<vmem>>, vector<8x8xf32>
    tpu.vector_store %arg13[%c0_5, %c16], %2 {strides = array<i32>} : memref<8x28xf32, #tpu.memory_space<vmem>>, vector<8x8xf32>,
    %c0_6 = arith.constant 0 : index
    %c0_7 = arith.constant 0 : index
    %4 = vector.load %arg3[%c0_6, %c0_7] : memref<8x4xf32, #tpu.memory_space<vmem>>, vector<8x4xf32>
    %c0_8 = arith.constant 0 : index
    %c24 = arith.constant 24 : index
    %5 = vector.load %arg13[%c0_8, %c24] : memref<8x28xf32, #tpu.memory_space<vmem>>, vector<8x4xf32>
    tpu.vector_store %arg13[%c0_8, %c24], %4 {strides = array<i32>} : memref<8x28xf32, #tpu.memory_space<vmem>>, vector<8x4xf32>,
    %c0_9 = arith.constant 0 : index
    %c0_10 = arith.constant 0 : index
    %6 = vector.load %arg13[%c0_9, %c0_10] : memref<8x28xf32, #tpu.memory_space<vmem>>, vector<8x28xf32>
    %7 = arith.truncf %6 : vector<8x28xf32> to vector<8x28xbf16>
    %c0_11 = arith.constant 0 : index
    %c0_12 = arith.constant 0 : index
    %8 = vector.load %arg4[%c0_11, %c0_12] : memref<28x256xbf16, #tpu.memory_space<vmem>>, vector<28x256xbf16>
    %cst = arith.constant dense<0.000000e+00> : vector<8x256xf32>
    %9 = tpu.matmul %7, %8, %cst {dimension_numbers = #tpu.dot_dimension_numbers<[1], [0], [0], [1], [0, 0, 1, 1], [], []>} : vector<8x28xbf16>, vector<28x256xbf16>, vector<8x256xf32> -> vector<8x256xf32>
    %c0_13 = arith.constant 0 : index
    %c0_14 = arith.constant 0 : index
    %10 = vector.load %arg5[%c0_13, %c0_14] : memref<1x256xf32, #tpu.memory_space<vmem>>, vector<1x256xf32>
    %11 = vector.broadcast %10 : vector<1x256xf32> to vector<8x256xf32>
    %12 = arith.addf %9, %11 : vector<8x256xf32>
    %cst_15 = arith.constant 0.000000e+00 : f32
    %13 = vector.broadcast %cst_15 : f32 to vector<8x256xf32>
    %14 = arith.maximumf %12, %13 : vector<8x256xf32>
    %15 = arith.truncf %14 : vector<8x256xf32> to vector<8x256xbf16>
    %c0_16 = arith.constant 0 : index
    %c0_17 = arith.constant 0 : index
    %16 = vector.load %arg6[%c0_16, %c0_17] : memref<256x256xbf16, #tpu.memory_space<vmem>>, vector<256x256xbf16>
    %cst_18 = arith.constant dense<0.000000e+00> : vector<8x256xf32>
    %17 = tpu.matmul %15, %16, %cst_18 {dimension_numbers = #tpu.dot_dimension_numbers<[1], [0], [0], [1], [0, 0, 1, 1], [], []>} : vector<8x256xbf16>, vector<256x256xbf16>, vector<8x256xf32> -> vector<8x256xf32>
    %c0_19 = arith.constant 0 : index
    %c0_20 = arith.constant 0 : index
    %18 = vector.load %arg7[%c0_19, %c0_20] : memref<1x256xf32, #tpu.memory_space<vmem>>, vector<1x256xf32>
    %19 = vector.broadcast %18 : vector<1x256xf32> to vector<8x256xf32>
    %20 = arith.addf %17, %19 : vector<8x256xf32>
    %cst_21 = arith.constant 0.000000e+00 : f32
    %21 = vector.broadcast %cst_21 : f32 to vector<8x256xf32>
    %22 = arith.maximumf %20, %21 : vector<8x256xf32>
    %23 = arith.truncf %22 : vector<8x256xf32> to vector<8x256xbf16>
    %c0_22 = arith.constant 0 : index
    %c0_23 = arith.constant 0 : index
    %24 = vector.load %arg8[%c0_22, %c0_23] : memref<256x256xbf16, #tpu.memory_space<vmem>>, vector<256x256xbf16>
    %cst_24 = arith.constant dense<0.000000e+00> : vector<8x256xf32>
    %25 = tpu.matmul %23, %24, %cst_24 {dimension_numbers = #tpu.dot_dimension_numbers<[1], [0], [0], [1], [0, 0, 1, 1], [], []>} : vector<8x256xbf16>, vector<256x256xbf16>, vector<8x256xf32> -> vector<8x256xf32>
    %c0_25 = arith.constant 0 : index
    %c0_26 = arith.constant 0 : index
    %26 = vector.load %arg9[%c0_25, %c0_26] : memref<1x256xf32, #tpu.memory_space<vmem>>, vector<1x256xf32>
    %27 = vector.broadcast %26 : vector<1x256xf32> to vector<8x256xf32>
    %28 = arith.addf %25, %27 : vector<8x256xf32>
    %cst_27 = arith.constant 0.000000e+00 : f32
    %29 = vector.broadcast %cst_27 : f32 to vector<8x256xf32>
    %30 = arith.maximumf %28, %29 : vector<8x256xf32>
    %c0_28 = arith.constant 0 : index
    %c0_29 = arith.constant 0 : index
    %31 = vector.load %arg10[%c0_28, %c0_29] : memref<1x256xbf16, #tpu.memory_space<vmem>>, vector<1x256xbf16>
    %32 = arith.truncf %30 : vector<8x256xf32> to vector<8x256xbf16>
    %cst_30 = arith.constant dense<0.000000e+00> : vector<1x8xf32>
    %33 = tpu.matmul %31, %32, %cst_30 {dimension_numbers = #tpu.dot_dimension_numbers<[1], [1], [0], [0], [0, 0, 1, 0], [], []>} : vector<1x256xbf16>, vector<8x256xbf16>, vector<1x8xf32> -> vector<1x8xf32>
    %c0_31 = arith.constant 0 : index
    %c0_32 = arith.constant 0 : index
    %34 = memref.load %arg11[%c0_31, %c0_32] : memref<1x1xf32, #tpu.memory_space<smem>>
    %35 = vector.broadcast %34 : f32 to vector<1x8xf32>
    %36 = arith.addf %33, %35 : vector<1x8xf32>
    %c0_33 = arith.constant 0 : index
    %c0_34 = arith.constant 0 : index
    %37 = vector.load %arg12[%c0_33, %c0_34] : memref<1x8xf32, #tpu.memory_space<vmem>>, vector<1x8xf32>
    tpu.vector_store %arg12[%c0_33, %c0_34], %36 {strides = array<i32>} : memref<1x8xf32, #tpu.memory_space<vmem>>, vector<1x8xf32>,
    return
  }
  func.func @transform_0(%arg0: i32) -> (i32, i32) {
    %c0_i32 = arith.constant 0 : i32
    %c0_i32_0 = arith.constant 0 : i32
    return %arg0, %c0_i32 : i32, i32
  }
  func.func @transform_1(%arg0: i32) -> (i32, i32) {
    %c0_i32 = arith.constant 0 : i32
    %c0_i32_0 = arith.constant 0 : i32
    return %arg0, %c0_i32 : i32, i32
  }
  func.func @transform_2(%arg0: i32) -> (i32, i32) {
    %c0_i32 = arith.constant 0 : i32
    %c0_i32_0 = arith.constant 0 : i32
    return %arg0, %c0_i32 : i32, i32
  }
  func.func @transform_3(%arg0: i32) -> (i32, i32) {
    %c0_i32 = arith.constant 0 : i32
    %c0_i32_0 = arith.constant 0 : i32
    %c0_i32_1 = arith.constant 0 : i32
    return %c0_i32, %c0_i32_0 : i32, i32
  }
  func.func @transform_4(%arg0: i32) -> (i32, i32) {
    %c0_i32 = arith.constant 0 : i32
    %c0_i32_0 = arith.constant 0 : i32
    %c0_i32_1 = arith.constant 0 : i32
    return %c0_i32, %c0_i32_0 : i32, i32
  }
  func.func @transform_5(%arg0: i32) -> (i32, i32) {
    %c0_i32 = arith.constant 0 : i32
    %c0_i32_0 = arith.constant 0 : i32
    %c0_i32_1 = arith.constant 0 : i32
    return %c0_i32, %c0_i32_0 : i32, i32
  }
  func.func @transform_6(%arg0: i32) -> (i32, i32) {
    %c0_i32 = arith.constant 0 : i32
    %c0_i32_0 = arith.constant 0 : i32
    %c0_i32_1 = arith.constant 0 : i32
    return %c0_i32, %c0_i32_0 : i32, i32
  }
  func.func @transform_7(%arg0: i32) -> (i32, i32) {
    %c0_i32 = arith.constant 0 : i32
    %c0_i32_0 = arith.constant 0 : i32
    %c0_i32_1 = arith.constant 0 : i32
    return %c0_i32, %c0_i32_0 : i32, i32
  }
  func.func @transform_8(%arg0: i32) -> (i32, i32) {
    %c0_i32 = arith.constant 0 : i32
    %c0_i32_0 = arith.constant 0 : i32
    %c0_i32_1 = arith.constant 0 : i32
    return %c0_i32, %c0_i32_0 : i32, i32
  }
  func.func @transform_9(%arg0: i32) -> (i32, i32) {
    %c0_i32 = arith.constant 0 : i32
    %c0_i32_0 = arith.constant 0 : i32
    %c0_i32_1 = arith.constant 0 : i32
    return %c0_i32, %c0_i32_0 : i32, i32
  }
  func.func @transform_10(%arg0: i32) -> (i32, i32) {
    %c0_i32 = arith.constant 0 : i32
    %c0_i32_0 = arith.constant 0 : i32
    %c0_i32_1 = arith.constant 0 : i32
    return %c0_i32, %c0_i32_0 : i32, i32
  }
  func.func @transform_11(%arg0: i32) -> (i32, i32) {
    %c0_i32 = arith.constant 0 : i32
    %c0_i32_0 = arith.constant 0 : i32
    return %c0_i32, %arg0 : i32, i32
  }
}

</mosaic_0001>

<llo_original>
// kernel: tpu_custom_call.1
$region0: #{tpu_custom_call.1}
  #allocation0 [shape = 'u32[]', space=smem, size = 0x4, offset = 0x4, fixed_abs, tag = 'smem constant byte address 0x4 - core index']
  #allocation1 [shape = 'u32[72,128]{1,0:T(1,128)}', space=vmem, size = 0x9000, scoped, tag = 'internal scratch']
  #allocation2 [shape = 'f32[8,28]{1,0:T(8,128)}', space=vmem, size = 0x1000, scoped, tag = 'scratch operand']
  #allocation3 [shape = 'f32[1,1]{1,0:T(1,128)S(6)}', space=smem, size = 0x200, scoped, tag = 'scoped memory for tpu_custom_call.1']
  %s0 = inlined_call_operand.vmem [shape: f32[8,16], index: 0, kind: input, shape index: {}]
  %s1 = inlined_call_operand.hbm [shape: f32[8,8], index: 1, kind: input, shape index: {}]
  %s2 = inlined_call_operand.vmem [shape: f32[8,4], index: 2, kind: input, shape index: {}]
  %s3 = inlined_call_operand.hbm [shape: bf16[28,256], index: 3, kind: input, shape index: {}]
  %s4 = inlined_call_operand.vmem [shape: f32[1,256], index: 4, kind: input, shape index: {}]
  %s5 = inlined_call_operand.hbm [shape: bf16[256,256], index: 5, kind: input, shape index: {}]
  %s6 = inlined_call_operand.vmem [shape: f32[1,256], index: 6, kind: input, shape index: {}]
  %s7 = inlined_call_operand.hbm [shape: bf16[256,256], index: 7, kind: input, shape index: {}]
  %s8 = inlined_call_operand.vmem [shape: f32[1,256], index: 8, kind: input, shape index: {}]
  %s9 = inlined_call_operand.vmem [shape: bf16[1,256], index: 9, kind: input, shape index: {}]
  %s10 = inlined_call_operand.<no memory space> [shape: f32[1,1], index: 10, kind: input, shape index: {}]
  %s11 = inlined_call_operand.hbm [shape: f32[1,8], index: 11, kind: output, shape index: {}]
  %s12 = sld [smem:[#allocation0]]
  $region70: #{tpu_custom_call.1} parent=0
    _
  %s14 = ssub.s32 1, %s12
  %s15 = scalar_select 0, %s14, %s12
  %16 = sst [smem:[#allocation3]] %s10
  $region1: #{tpu_custom_call.1} parent=0
    #allocation4 [shape = 'u8[4096]{0}', space=vmem, size = 0x1000, scoped, tag = 'input window, operand 1, single buffered']
    #allocation5 [shape = 's32[1]{0}', space=sflag, size = 0x4, scoped, tag = 'scoped memory for tpu_custom_call.1']
    #allocation6 [shape = 's32[1]{0}', space=sflag, size = 0x4, scoped, tag = 'scoped memory for tpu_custom_call.1']
    #allocation7 [shape = 'u8[16384]{0}', space=vmem, size = 0x4000, scoped, tag = 'input window, operand 3, single buffered']
    #allocation8 [shape = 's32[1]{0}', space=sflag, size = 0x4, scoped, tag = 'scoped memory for tpu_custom_call.1']
    #allocation9 [shape = 'u8[131072]{0}', space=vmem, size = 0x20000, scoped, tag = 'input window, operand 5, single buffered']
    #allocation10 [shape = 'u8[131072]{0}', space=vmem, size = 0x20000, scoped, tag = 'input window, operand 7, single buffered']
    #allocation11 [shape = 's32[1]{0}', space=sflag, size = 0x4, scoped, tag = 'scoped memory for tpu_custom_call.1']
    #allocation12 [shape = 'u8[512]{0}', space=vmem, size = 0x400, scoped, tag = 'output window, operand 0, single buffered']
    %17 = vsyncpa [#allocation5], 0
    %18 = vsyncpa [#allocation8], 0
    %19 = vsyncpa [#allocation11], 0
    %20 = vsyncpa [#allocation6], 0
    // Predicated region
    $region2: #{tpu_custom_call.1} parent=1 // pred_check
      _
    $region3: #{tpu_custom_call.1} parent=1 // pred_check_branch
      %22 = sbr.rel (0) target = $region5
    $region4: #{tpu_custom_call.1} parent=1 // pred_region
      _
    $region5: #{tpu_custom_call.1} parent=1 // pred_fallthru
      _
    // Predicated region
    $region6: #{tpu_custom_call.1} parent=1 // pred_check
      _
    $region7: #{tpu_custom_call.1} parent=1 // pred_check_branch
      %24 = sbr.rel (0) target = $region9
    $region8: #{tpu_custom_call.1} parent=1 // pred_region
      %26 = vsyncadd [#allocation5], 0
      %s28 = sshll.u32 %s1, 4
      %s29 = int_to_ptr.hbm [resolvable:$true] %s28
      %s30 = sshll.u32 [#allocation4], 4
      %s31 = int_to_ptr.vmem [resolvable:$true] %s30
      %33 = dma.hbm_to_vmem [thread:$0]  %s29, 128, %s31, [#allocation5]
    $region9: #{tpu_custom_call.1} parent=1 // pred_fallthru
      _
    // Predicated region
    $region10: #{tpu_custom_call.1} parent=1 // pred_check
      _
    $region11: #{tpu_custom_call.1} parent=1 // pred_check_branch
      %35 = sbr.rel (0) target = $region13
    $region12: #{tpu_custom_call.1} parent=1 // pred_region
      _
    $region13: #{tpu_custom_call.1} parent=1 // pred_fallthru
      _
    // Predicated region
    $region14: #{tpu_custom_call.1} parent=1 // pred_check
      _
    $region15: #{tpu_custom_call.1} parent=1 // pred_check_branch
      %37 = sbr.rel (0) target = $region17
    $region16: #{tpu_custom_call.1} parent=1 // pred_region
      %39 = vsyncadd [#allocation8], 0
      %s40 = sshll.u32 %s3, 4
      %s41 = int_to_ptr.hbm [resolvable:$true] %s40
      %s42 = sshll.u32 [#allocation7], 4
      %s43 = int_to_ptr.vmem [resolvable:$true] %s42
      %48 = dma.hbm_to_vmem [thread:$0]  %s41, 512, %s43, [#allocation8], 128, 128, 8
    $region17: #{tpu_custom_call.1} parent=1 // pred_fallthru
      _
    // Predicated region
    $region18: #{tpu_custom_call.1} parent=1 // pred_check
      _
    $region19: #{tpu_custom_call.1} parent=1 // pred_check_branch
      %50 = sbr.rel (0) target = $region21
    $region20: #{tpu_custom_call.1} parent=1 // pred_region
      _
    $region21: #{tpu_custom_call.1} parent=1 // pred_fallthru
      _
    // Predicated region
    $region22: #{tpu_custom_call.1} parent=1 // pred_check
      _
    $region23: #{tpu_custom_call.1} parent=1 // pred_check_branch
      %52 = sbr.rel (0) target = $region25
    $region24: #{tpu_custom_call.1} parent=1 // pred_region
      %54 = vsyncadd [#allocation8], 0
      %s55 = sshll.u32 %s5, 4
      %s56 = int_to_ptr.hbm [resolvable:$true] %s55
      %s57 = sshll.u32 [#allocation9], 4
      %s58 = int_to_ptr.vmem [resolvable:$true] %s57
      %63 = dma.hbm_to_vmem [thread:$0]  %s56, 4096, %s58, [#allocation8], 128, 128, 8
    $region25: #{tpu_custom_call.1} parent=1 // pred_fallthru
      _
    // Predicated region
    $region26: #{tpu_custom_call.1} parent=1 // pred_check
      _
    $region27: #{tpu_custom_call.1} parent=1 // pred_check_branch
      %65 = sbr.rel (0) target = $region29
    $region28: #{tpu_custom_call.1} parent=1 // pred_region
      _
    $region29: #{tpu_custom_call.1} parent=1 // pred_fallthru
      _
    // Predicated region
    $region30: #{tpu_custom_call.1} parent=1 // pred_check
      _
    $region31: #{tpu_custom_call.1} parent=1 // pred_check_branch
      %67 = sbr.rel (0) target = $region33
    $region32: #{tpu_custom_call.1} parent=1 // pred_region
      %69 = vsyncadd [#allocation11], 0
      %s70 = sshll.u32 %s7, 4
      %s71 = int_to_ptr.hbm [resolvable:$true] %s70
      %s72 = sshll.u32 [#allocation10], 4
      %s73 = int_to_ptr.vmem [resolvable:$true] %s72
      %78 = dma.hbm_to_vmem [thread:$0]  %s71, 4096, %s73, [#allocation11], 128, 128, 8
    $region33: #{tpu_custom_call.1} parent=1 // pred_fallthru
      _
    // Predicated region
    $region34: #{tpu_custom_call.1} parent=1 // pred_check
      _
    $region35: #{tpu_custom_call.1} parent=1 // pred_check_branch
      %80 = sbr.rel (0) target = $region37
    $region36: #{tpu_custom_call.1} parent=1 // pred_region
      _
    $region37: #{tpu_custom_call.1} parent=1 // pred_fallthru
      _
    // Predicated region
    $region38: #{tpu_custom_call.1} parent=1 // pred_check
      _
    $region39: #{tpu_custom_call.1} parent=1 // pred_check_branch
      %82 = sbr.rel (0) target = $region41
    $region40: #{tpu_custom_call.1} parent=1 // pred_region
      _
    $region41: #{tpu_custom_call.1} parent=1 // pred_fallthru
      _
    // Predicated region
    $region42: #{tpu_custom_call.1} parent=1 // pred_check
      _
    $region43: #{tpu_custom_call.1} parent=1 // pred_check_branch
      %84 = sbr.rel (0) target = $region45
    $region44: #{tpu_custom_call.1} parent=1 // pred_region
      _
    $region45: #{tpu_custom_call.1} parent=1 // pred_fallthru
      _
    // Predicated region
    $region46: #{tpu_custom_call.1} parent=1 // pred_check
      _
    $region47: #{tpu_custom_call.1} parent=1 // pred_check_branch
      %86 = sbr.rel (0) target = $region49
    $region48: #{tpu_custom_call.1} parent=1 // pred_region
      %88 = dma.done [#allocation5], 128
    $region49: #{tpu_custom_call.1} parent=1 // pred_fallthru
      _
    // Predicated region
    $region50: #{tpu_custom_call.1} parent=1 // pred_check
      _
    $region51: #{tpu_custom_call.1} parent=1 // pred_check_branch
      %90 = sbr.rel (0) target = $region53
    $region52: #{tpu_custom_call.1} parent=1 // pred_region
      %92 = dma.done [#allocation8], 512
    $region53: #{tpu_custom_call.1} parent=1 // pred_fallthru
      _
    // Predicated region
    $region54: #{tpu_custom_call.1} parent=1 // pred_check
      _
    $region55: #{tpu_custom_call.1} parent=1 // pred_check_branch
      %94 = sbr.rel (0) target = $region57
    $region56: #{tpu_custom_call.1} parent=1 // pred_region
      %96 = dma.done [#allocation8], 4096
    $region57: #{tpu_custom_call.1} parent=1 // pred_fallthru
      _
    // Predicated region
    $region58: #{tpu_custom_call.1} parent=1 // pred_check
      _
    $region59: #{tpu_custom_call.1} parent=1 // pred_check_branch
      %98 = sbr.rel (0) target = $region61
    $region60: #{tpu_custom_call.1} parent=1 // pred_region
      %100 = dma.done [#allocation11], 4096
    $region61: #{tpu_custom_call.1} parent=1 // pred_fallthru
      _
    %v102 = vld [vmem:[%s0] sm:$0xff]
    %vm103 = vcmask 130048
    %104 = vst.msk [vmem:[#allocation2] sm:$0xff] %vm103, %v102
    %v105 = vld [vmem:[#allocation4] sm:$0xff]
    %107 = vrot.lane.b32.xlu0 %v105, 16
    %v108 = vpop.permute.xlu0 %107
    %vm110 = vcmask 195712
    %111 = vst.msk [vmem:[#allocation2] sm:$0xff] %vm110, %v108
    %v112 = vld [vmem:[%s2] sm:$0xff]
    %114 = vrot.lane.b32.xlu0 %v112, 24
    %v115 = vpop.permute.xlu0 %114
    %vm117 = vcmask 228544
    %118 = vst.msk [vmem:[#allocation2] sm:$0xff] %vm117, %v115
    %v119 = vld [vmem:[#allocation2] sm:$0xff]
    %v120 = vpack.c.bf16 %v119, %v119
    %v121 = vld [vmem:[#allocation7] sm:$0xff]
    %v122 = vld [vmem:[#allocation7 + $0x8] sm:$0xff]
    %v123 = vld [vmem:[#allocation7 + $0x10] sm:$0xff]
    %v124 = vld [vmem:[#allocation7 + $0x18] sm:$0x33]
    %v125 = vld [vmem:[%s4] sm:$0x3]
    %v127 = vperm.slane %v125, 0
    %v128 = vperm.slane %v125, 1
    %v135 = vunpack.c.l.b16 %v121
    %v136 = vunpack.c.h.b16 %v121
    %v137 = vunpack.c.l.b16 %v122
    %v138 = vunpack.c.h.b16 %v122
    %v139 = vunpack.c.l.b16 %v123
    %v140 = vunpack.c.h.b16 %v123
    %v141 = vunpack.c.l.b16 %v124
    %v142 = vunpack.c.h.b16 %v124
    %v143 = vpack.c.b16 %v137, %v135
    %v144 = vpack.c.b16 %v138, %v136
    %v145 = vpack.c.b16 %v141, %v139
    %v146 = vpack.c.b16 %v142, %v140
    %vm149 = vcmask 228352
    %v151 = vsel %vm149, %v120, 0
    %vm153 = vcmask 1045504
    %v155 = vsel %vm153, %v145, 0
    %v158 = vsel %vm153, %v146, 0
    %160 = vmatpush.bf16.msra.mxu0 0
    %161 = vmatpush.bf16.msra.mxu0 0
    %162 = vmatpush.bf16.msra.mxu0 0
    %163 = vmatpush.bf16.msra.mxu0 0
    %164 = vmatpush.bf16.msra.mxu0 0
    %165 = vmatpush.bf16.msra.mxu0 0
    %166 = vmatpush.bf16.msra.mxu0 %v155
    %167 = vmatpush.bf16.msra.mxu0 %v143
    %168 = vmatmul.bf16.gmra.mxu0 %v151
    %v169 = vpop.f32.mrf.mxu0
    %v170 = vadd.f32 %v127, %v169
    %v171 = vpop.f32.mrf.mxu0
    %172 = vdwg.mxu0
    %173 = vmatpush.bf16.msra.mxu0 0
    %174 = vmatpush.bf16.msra.mxu0 0
    %175 = vmatpush.bf16.msra.mxu0 0
    %176 = vmatpush.bf16.msra.mxu0 0
    %177 = vmatpush.bf16.msra.mxu0 0
    %178 = vmatpush.bf16.msra.mxu0 0
    %179 = vmatpush.bf16.msra.mxu0 %v158
    %180 = vmatpush.bf16.msra.mxu0 %v144
    %181 = vmatmul.bf16.gmra.mxu0 %v151
    %v182 = vpop.f32.mrf.mxu0
    %v183 = vadd.f32 %v128, %v182
    %v184 = vpop.f32.mrf.mxu0
    %185 = vdwg.mxu0
    %v186 = vmax.f32 %v170, 0.0
    %v187 = vmax.f32 %v183, 0.0
    %v188 = vpack.c.bf16 %v186, %v186
    %v189 = vpack.c.bf16 %v187, %v187
    %v190 = vld [vmem:[#allocation9] sm:$0xff]
    %v191 = vld [vmem:[#allocation9 + $0x8] sm:$0xff]
    %v192 = vld [vmem:[#allocation9 + $0x10] sm:$0xff]
    %v193 = vld [vmem:[#allocation9 + $0x18] sm:$0xff]
    %v194 = vld [vmem:[#allocation9 + $0x20] sm:$0xff]
    %v195 = vld [vmem:[#allocation9 + $0x28] sm:$0xff]
    %v196 = vld [vmem:[#allocation9 + $0x30] sm:$0xff]
    %v197 = vld [vmem:[#allocation9 + $0x38] sm:$0xff]
    %v198 = vld [vmem:[#allocation9 + $0x40] sm:$0xff]
    %v199 = vld [vmem:[#allocation9 + $0x48] sm:$0xff]
    %v200 = vld [vmem:[#allocation9 + $0x50] sm:$0xff]
    %v201 = vld [vmem:[#allocation9 + $0x58] sm:$0xff]
    %v202 = vld [vmem:[#allocation9 + $0x60] sm:$0xff]
    %v203 = vld [vmem:[#allocation9 + $0x68] sm:$0xff]
    %v204 = vld [vmem:[#allocation9 + $0x70] sm:$0xff]
    %v205 = vld [vmem:[#allocation9 + $0x78] sm:$0xff]
    %v206 = vld [vmem:[#allocation9 + $0x80] sm:$0xff]
    %v207 = vld [vmem:[#allocation9 + $0x88] sm:$0xff]
    %v208 = vld [vmem:[#allocation9 + $0x90] sm:$0xff]
    %v209 = vld [vmem:[#allocation9 + $0x98] sm:$0xff]
    %v210 = vld [vmem:[#allocation9 + $0xa0] sm:$0xff]
    %v211 = vld [vmem:[#allocation9 + $0xa8] sm:$0xff]
    %v212 = vld [vmem:[#allocation9 + $0xb0] sm:$0xff]
    %v213 = vld [vmem:[#allocation9 + $0xb8] sm:$0xff]
    %v214 = vld [vmem:[#allocation9 + $0xc0] sm:$0xff]
    %v215 = vld [vmem:[#allocation9 + $0xc8] sm:$0xff]
    %v216 = vld [vmem:[#allocation9 + $0xd0] sm:$0xff]
    %v217 = vld [vmem:[#allocation9 + $0xd8] sm:$0xff]
    %v218 = vld [vmem:[#allocation9 + $0xe0] sm:$0xff]
    %v219 = vld [vmem:[#allocation9 + $0xe8] sm:$0xff]
    %v220 = vld [vmem:[#allocation9 + $0xf0] sm:$0xff]
    %v221 = vld [vmem:[#allocation9 + $0xf8] sm:$0xff]
    %v222 = vld [vmem:[%s6] sm:$0x3]
    %v224 = vperm.slane %v222, 0
    %v225 = vperm.slane %v222, 1
    %v260 = vunpack.c.l.b16 %v190
    %v261 = vunpack.c.h.b16 %v190
    %v262 = vunpack.c.l.b16 %v191
    %v263 = vunpack.c.h.b16 %v191
    %v264 = vunpack.c.l.b16 %v192
    %v265 = vunpack.c.h.b16 %v192
    %v266 = vunpack.c.l.b16 %v193
    %v267 = vunpack.c.h.b16 %v193
    %v268 = vunpack.c.l.b16 %v194
    %v269 = vunpack.c.h.b16 %v194
    %v270 = vunpack.c.l.b16 %v195
    %v271 = vunpack.c.h.b16 %v195
    %v272 = vunpack.c.l.b16 %v196
    %v273 = vunpack.c.h.b16 %v196
    %v274 = vunpack.c.l.b16 %v197
    %v275 = vunpack.c.h.b16 %v197
    %v276 = vunpack.c.l.b16 %v198
    %v277 = vunpack.c.h.b16 %v198
    %v278 = vunpack.c.l.b16 %v199
    %v279 = vunpack.c.h.b16 %v199
    %v280 = vunpack.c.l.b16 %v200
    %v281 = vunpack.c.h.b16 %v200
    %v282 = vunpack.c.l.b16 %v201
    %v283 = vunpack.c.h.b16 %v201
    %v284 = vunpack.c.l.b16 %v202
    %v285 = vunpack.c.h.b16 %v202
    %v286 = vunpack.c.l.b16 %v203
    %v287 = vunpack.c.h.b16 %v203
    %v288 = vunpack.c.l.b16 %v204
    %v289 = vunpack.c.h.b16 %v204
    %v290 = vunpack.c.l.b16 %v205
    %v291 = vunpack.c.h.b16 %v205
    %v292 = vunpack.c.l.b16 %v206
    %v293 = vunpack.c.h.b16 %v206
    %v294 = vunpack.c.l.b16 %v207
    %v295 = vunpack.c.h.b16 %v207
    %v296 = vunpack.c.l.b16 %v208
    %v297 = vunpack.c.h.b16 %v208
    %v298 = vunpack.c.l.b16 %v209
    %v299 = vunpack.c.h.b16 %v209
    %v300 = vunpack.c.l.b16 %v210
    %v301 = vunpack.c.h.b16 %v210
    %v302 = vunpack.c.l.b16 %v211
    %v303 = vunpack.c.h.b16 %v211
    %v304 = vunpack.c.l.b16 %v212
    %v305 = vunpack.c.h.b16 %v212
    %v306 = vunpack.c.l.b16 %v213
    %v307 = vunpack.c.h.b16 %v213
    %v308 = vunpack.c.l.b16 %v214
    %v309 = vunpack.c.h.b16 %v214
    %v310 = vunpack.c.l.b16 %v215
    %v311 = vunpack.c.h.b16 %v215
    %v312 = vunpack.c.l.b16 %v216
    %v313 = vunpack.c.h.b16 %v216
    %v314 = vunpack.c.l.b16 %v217
    %v315 = vunpack.c.h.b16 %v217
    %v316 = vunpack.c.l.b16 %v218
    %v317 = vunpack.c.h.b16 %v218
    %v318 = vunpack.c.l.b16 %v219
    %v319 = vunpack.c.h.b16 %v219
    %v320 = vunpack.c.l.b16 %v220
    %v321 = vunpack.c.h.b16 %v220
    %v322 = vunpack.c.l.b16 %v221
    %v323 = vunpack.c.h.b16 %v221
    %v324 = vpack.c.b16 %v262, %v260
    %v325 = vpack.c.b16 %v263, %v261
    %v326 = vpack.c.b16 %v266, %v264
    %v327 = vpack.c.b16 %v267, %v265
    %v328 = vpack.c.b16 %v270, %v268
    %v329 = vpack.c.b16 %v271, %v269
    %v330 = vpack.c.b16 %v274, %v272
    %v331 = vpack.c.b16 %v275, %v273
    %v332 = vpack.c.b16 %v278, %v276
    %v333 = vpack.c.b16 %v279, %v277
    %v334 = vpack.c.b16 %v282, %v280
    %v335 = vpack.c.b16 %v283, %v281
    %v336 = vpack.c.b16 %v286, %v284
    %v337 = vpack.c.b16 %v287, %v285
    %v338 = vpack.c.b16 %v290, %v288
    %v339 = vpack.c.b16 %v291, %v289
    %v340 = vpack.c.b16 %v294, %v292
    %v341 = vpack.c.b16 %v295, %v293
    %v342 = vpack.c.b16 %v298, %v296
    %v343 = vpack.c.b16 %v299, %v297
    %v344 = vpack.c.b16 %v302, %v300
    %v345 = vpack.c.b16 %v303, %v301
    %v346 = vpack.c.b16 %v306, %v304
    %v347 = vpack.c.b16 %v307, %v305
    %v348 = vpack.c.b16 %v310, %v308
    %v349 = vpack.c.b16 %v311, %v309
    %v350 = vpack.c.b16 %v314, %v312
    %v351 = vpack.c.b16 %v315, %v313
    %v352 = vpack.c.b16 %v318, %v316
    %v353 = vpack.c.b16 %v319, %v317
    %v354 = vpack.c.b16 %v322, %v320
    %v355 = vpack.c.b16 %v323, %v321
    %388 = vmatpush.bf16.msra.mxu0 %v338
    %389 = vmatpush.bf16.msra.mxu0 %v336
    %390 = vmatpush.bf16.msra.mxu0 %v334
    %391 = vmatpush.bf16.msra.mxu0 %v332
    %392 = vmatpush.bf16.msra.mxu0 %v330
    %393 = vmatpush.bf16.msra.mxu0 %v328
    %394 = vmatpush.bf16.msra.mxu0 %v326
    %395 = vmatpush.bf16.msra.mxu0 %v324
    %396 = vmatmul.bf16.gmra.mxu0 %v188
    %v397 = vpop.f32.mrf.mxu0
    %v398 = vadd.f32 %v224, %v397
    %v399 = vpop.f32.mrf.mxu0
    %400 = vdwg.mxu0
    %401 = vmatpush.bf16.msra.mxu0 %v354
    %402 = vmatpush.bf16.msra.mxu0 %v352
    %403 = vmatpush.bf16.msra.mxu0 %v350
    %404 = vmatpush.bf16.msra.mxu0 %v348
    %405 = vmatpush.bf16.msra.mxu0 %v346
    %406 = vmatpush.bf16.msra.mxu0 %v344
    %407 = vmatpush.bf16.msra.mxu0 %v342
    %408 = vmatpush.bf16.msra.mxu0 %v340
    %409 = vmatmul.bf16.gmra.mxu0 %v189
    %v410 = vpop.f32.mrf.mxu0
    %v411 = vadd.f32 %v398, %v410
    %v412 = vpop.f32.mrf.mxu0
    %413 = vdwg.mxu0
    %414 = vmatpush.bf16.msra.mxu0 %v339
    %415 = vmatpush.bf16.msra.mxu0 %v337
    %416 = vmatpush.bf16.msra.mxu0 %v335
    %417 = vmatpush.bf16.msra.mxu0 %v333
    %418 = vmatpush.bf16.msra.mxu0 %v331
    %419 = vmatpush.bf16.msra.mxu0 %v329
    %420 = vmatpush.bf16.msra.mxu0 %v327
    %421 = vmatpush.bf16.msra.mxu0 %v325
    %422 = vmatmul.bf16.gmra.mxu0 %v188
    %v423 = vpop.f32.mrf.mxu0
    %v424 = vadd.f32 %v225, %v423
    %v425 = vpop.f32.mrf.mxu0
    %426 = vdwg.mxu0
    %427 = vmatpush.bf16.msra.mxu0 %v355
    %428 = vmatpush.bf16.msra.mxu0 %v353
    %429 = vmatpush.bf16.msra.mxu0 %v351
    %430 = vmatpush.bf16.msra.mxu0 %v349
    %431 = vmatpush.bf16.msra.mxu0 %v347
    %432 = vmatpush.bf16.msra.mxu0 %v345
    %433 = vmatpush.bf16.msra.mxu0 %v343
    %434 = vmatpush.bf16.msra.mxu0 %v341
    %435 = vmatmul.bf16.gmra.mxu0 %v189
    %v436 = vpop.f32.mrf.mxu0
    %v437 = vadd.f32 %v424, %v436
    %v438 = vpop.f32.mrf.mxu0
    %439 = vdwg.mxu0
    %v440 = vmax.f32 %v411, 0.0
    %v441 = vmax.f32 %v437, 0.0
    %v442 = vpack.c.bf16 %v440, %v440
    %v443 = vpack.c.bf16 %v441, %v441
    %v444 = vld [vmem:[#allocation10] sm:$0xff]
    %v445 = vld [vmem:[#allocation10 + $0x8] sm:$0xff]
    %v446 = vld [vmem:[#allocation10 + $0x10] sm:$0xff]
    %v447 = vld [vmem:[#allocation10 + $0x18] sm:$0xff]
    %v448 = vld [vmem:[#allocation10 + $0x20] sm:$0xff]
    %v449 = vld [vmem:[#allocation10 + $0x28] sm:$0xff]
    %v450 = vld [vmem:[#allocation10 + $0x30] sm:$0xff]
    %v451 = vld [vmem:[#allocation10 + $0x38] sm:$0xff]
    %v452 = vld [vmem:[#allocation10 + $0x40] sm:$0xff]
    %v453 = vld [vmem:[#allocation10 + $0x48] sm:$0xff]
    %v454 = vld [vmem:[#allocation10 + $0x50] sm:$0xff]
    %v455 = vld [vmem:[#allocation10 + $0x58] sm:$0xff]
    %v456 = vld [vmem:[#allocation10 + $0x60] sm:$0xff]
    %v457 = vld [vmem:[#allocation10 + $0x68] sm:$0xff]
    %v458 = vld [vmem:[#allocation10 + $0x70] sm:$0xff]
    %v459 = vld [vmem:[#allocation10 + $0x78] sm:$0xff]
    %v460 = vld [vmem:[#allocation10 + $0x80] sm:$0xff]
    %v461 = vld [vmem:[#allocation10 + $0x88] sm:$0xff]
    %v462 = vld [vmem:[#allocation10 + $0x90] sm:$0xff]
    %v463 = vld [vmem:[#allocation10 + $0x98] sm:$0xff]
    %v464 = vld [vmem:[#allocation10 + $0xa0] sm:$0xff]
    %v465 = vld [vmem:[#allocation10 + $0xa8] sm:$0xff]
    %v466 = vld [vmem:[#allocation10 + $0xb0] sm:$0xff]
    %v467 = vld [vmem:[#allocation10 + $0xb8] sm:$0xff]
    %v468 = vld [vmem:[#allocation10 + $0xc0] sm:$0xff]
    %v469 = vld [vmem:[#allocation10 + $0xc8] sm:$0xff]
    %v470 = vld [vmem:[#allocation10 + $0xd0] sm:$0xff]
    %v471 = vld [vmem:[#allocation10 + $0xd8] sm:$0xff]
    %v472 = vld [vmem:[#allocation10 + $0xe0] sm:$0xff]
    %v473 = vld [vmem:[#allocation10 + $0xe8] sm:$0xff]
    %v474 = vld [vmem:[#allocation10 + $0xf0] sm:$0xff]
    %v475 = vld [vmem:[#allocation10 + $0xf8] sm:$0xff]
    %v476 = vld [vmem:[%s8] sm:$0x3]
    %v478 = vperm.slane %v476, 0
    %v479 = vperm.slane %v476, 1
    %v514 = vunpack.c.l.b16 %v444
    %v515 = vunpack.c.h.b16 %v444
    %v516 = vunpack.c.l.b16 %v445
    %v517 = vunpack.c.h.b16 %v445
    %v518 = vunpack.c.l.b16 %v446
    %v519 = vunpack.c.h.b16 %v446
    %v520 = vunpack.c.l.b16 %v447
    %v521 = vunpack.c.h.b16 %v447
    %v522 = vunpack.c.l.b16 %v448
    %v523 = vunpack.c.h.b16 %v448
    %v524 = vunpack.c.l.b16 %v449
    %v525 = vunpack.c.h.b16 %v449
    %v526 = vunpack.c.l.b16 %v450
    %v527 = vunpack.c.h.b16 %v450
    %v528 = vunpack.c.l.b16 %v451
    %v529 = vunpack.c.h.b16 %v451
    %v530 = vunpack.c.l.b16 %v452
    %v531 = vunpack.c.h.b16 %v452
    %v532 = vunpack.c.l.b16 %v453
    %v533 = vunpack.c.h.b16 %v453
    %v534 = vunpack.c.l.b16 %v454
    %v535 = vunpack.c.h.b16 %v454
    %v536 = vunpack.c.l.b16 %v455
    %v537 = vunpack.c.h.b16 %v455
    %v538 = vunpack.c.l.b16 %v456
    %v539 = vunpack.c.h.b16 %v456
    %v540 = vunpack.c.l.b16 %v457
    %v541 = vunpack.c.h.b16 %v457
    %v542 = vunpack.c.l.b16 %v458
    %v543 = vunpack.c.h.b16 %v458
    %v544 = vunpack.c.l.b16 %v459
    %v545 = vunpack.c.h.b16 %v459
    %v546 = vunpack.c.l.b16 %v460
    %v547 = vunpack.c.h.b16 %v460
    %v548 = vunpack.c.l.b16 %v461
    %v549 = vunpack.c.h.b16 %v461
    %v550 = vunpack.c.l.b16 %v462
    %v551 = vunpack.c.h.b16 %v462
    %v552 = vunpack.c.l.b16 %v463
    %v553 = vunpack.c.h.b16 %v463
    %v554 = vunpack.c.l.b16 %v464
    %v555 = vunpack.c.h.b16 %v464
    %v556 = vunpack.c.l.b16 %v465
    %v557 = vunpack.c.h.b16 %v465
    %v558 = vunpack.c.l.b16 %v466
    %v559 = vunpack.c.h.b16 %v466
    %v560 = vunpack.c.l.b16 %v467
    %v561 = vunpack.c.h.b16 %v467
    %v562 = vunpack.c.l.b16 %v468
    %v563 = vunpack.c.h.b16 %v468
    %v564 = vunpack.c.l.b16 %v469
    %v565 = vunpack.c.h.b16 %v469
    %v566 = vunpack.c.l.b16 %v470
    %v567 = vunpack.c.h.b16 %v470
    %v568 = vunpack.c.l.b16 %v471
    %v569 = vunpack.c.h.b16 %v471
    %v570 = vunpack.c.l.b16 %v472
    %v571 = vunpack.c.h.b16 %v472
    %v572 = vunpack.c.l.b16 %v473
    %v573 = vunpack.c.h.b16 %v473
    %v574 = vunpack.c.l.b16 %v474
    %v575 = vunpack.c.h.b16 %v474
    %v576 = vunpack.c.l.b16 %v475
    %v577 = vunpack.c.h.b16 %v475
    %v578 = vpack.c.b16 %v516, %v514
    %v579 = vpack.c.b16 %v517, %v515
    %v580 = vpack.c.b16 %v520, %v518
    %v581 = vpack.c.b16 %v521, %v519
    %v582 = vpack.c.b16 %v524, %v522
    %v583 = vpack.c.b16 %v525, %v523
    %v584 = vpack.c.b16 %v528, %v526
    %v585 = vpack.c.b16 %v529, %v527
    %v586 = vpack.c.b16 %v532, %v530
    %v587 = vpack.c.b16 %v533, %v531
    %v588 = vpack.c.b16 %v536, %v534
    %v589 = vpack.c.b16 %v537, %v535
    %v590 = vpack.c.b16 %v540, %v538
    %v591 = vpack.c.b16 %v541, %v539
    %v592 = vpack.c.b16 %v544, %v542
    %v593 = vpack.c.b16 %v545, %v543
    %v594 = vpack.c.b16 %v548, %v546
    %v595 = vpack.c.b16 %v549, %v547
    %v596 = vpack.c.b16 %v552, %v550
    %v597 = vpack.c.b16 %v553, %v551
    %v598 = vpack.c.b16 %v556, %v554
    %v599 = vpack.c.b16 %v557, %v555
    %v600 = vpack.c.b16 %v560, %v558
    %v601 = vpack.c.b16 %v561, %v559
    %v602 = vpack.c.b16 %v564, %v562
    %v603 = vpack.c.b16 %v565, %v563
    %v604 = vpack.c.b16 %v568, %v566
    %v605 = vpack.c.b16 %v569, %v567
    %v606 = vpack.c.b16 %v572, %v570
    %v607 = vpack.c.b16 %v573, %v571
    %v608 = vpack.c.b16 %v576, %v574
    %v609 = vpack.c.b16 %v577, %v575
    %642 = vmatpush.bf16.msra.mxu0 %v592
    %643 = vmatpush.bf16.msra.mxu0 %v590
    %644 = vmatpush.bf16.msra.mxu0 %v588
    %645 = vmatpush.bf16.msra.mxu0 %v586
    %646 = vmatpush.bf16.msra.mxu0 %v584
    %647 = vmatpush.bf16.msra.mxu0 %v582
    %648 = vmatpush.bf16.msra.mxu0 %v580
    %649 = vmatpush.bf16.msra.mxu0 %v578
    %650 = vmatmul.bf16.gmra.mxu0 %v442
    %v651 = vpop.f32.mrf.mxu0
    %v652 = vadd.f32 %v478, %v651
    %v653 = vpop.f32.mrf.mxu0
    %654 = vdwg.mxu0
    %655 = vmatpush.bf16.msra.mxu0 %v608
    %656 = vmatpush.bf16.msra.mxu0 %v606
    %657 = vmatpush.bf16.msra.mxu0 %v604
    %658 = vmatpush.bf16.msra.mxu0 %v602
    %659 = vmatpush.bf16.msra.mxu0 %v600
    %660 = vmatpush.bf16.msra.mxu0 %v598
    %661 = vmatpush.bf16.msra.mxu0 %v596
    %662 = vmatpush.bf16.msra.mxu0 %v594
    %663 = vmatmul.bf16.gmra.mxu0 %v443
    %v664 = vpop.f32.mrf.mxu0
    %v665 = vadd.f32 %v652, %v664
    %v666 = vpop.f32.mrf.mxu0
    %667 = vdwg.mxu0
    %668 = vmatpush.bf16.msra.mxu0 %v593
    %669 = vmatpush.bf16.msra.mxu0 %v591
    %670 = vmatpush.bf16.msra.mxu0 %v589
    %671 = vmatpush.bf16.msra.mxu0 %v587
    %672 = vmatpush.bf16.msra.mxu0 %v585
    %673 = vmatpush.bf16.msra.mxu0 %v583
    %674 = vmatpush.bf16.msra.mxu0 %v581
    %675 = vmatpush.bf16.msra.mxu0 %v579
    %676 = vmatmul.bf16.gmra.mxu0 %v442
    %v677 = vpop.f32.mrf.mxu0
    %v678 = vadd.f32 %v479, %v677
    %v679 = vpop.f32.mrf.mxu0
    %680 = vdwg.mxu0
    %681 = vmatpush.bf16.msra.mxu0 %v609
    %682 = vmatpush.bf16.msra.mxu0 %v607
    %683 = vmatpush.bf16.msra.mxu0 %v605
    %684 = vmatpush.bf16.msra.mxu0 %v603
    %685 = vmatpush.bf16.msra.mxu0 %v601
    %686 = vmatpush.bf16.msra.mxu0 %v599
    %687 = vmatpush.bf16.msra.mxu0 %v597
    %688 = vmatpush.bf16.msra.mxu0 %v595
    %689 = vmatmul.bf16.gmra.mxu0 %v443
    %v690 = vpop.f32.mrf.mxu0
    %v691 = vadd.f32 %v678, %v690
    %v692 = vpop.f32.mrf.mxu0
    %693 = vdwg.mxu0
    %v694 = vmax.f32 %v665, 0.0
    %v695 = vmax.f32 %v691, 0.0
    %v696 = vld [vmem:[%s9] sm:$0x3]
    %v697 = vpack.c.bf16 %v694, %v694
    %v698 = vpack.c.bf16 %v695, %v695
    %s699 = sld [smem:[#allocation3]]
    %v700 = vstv %s699
    %702 = vst [vmem:[#allocation1] ss:$9 sm:$0xff] %v696
    %v703 = vld [vmem:[#allocation1] sm:$0xff]
    %v704 = vld [vmem:[#allocation1 + $0x9] sm:$0xff]
    %707 = vmatpush.bf16.xpose.msra.mxu0 0
    %708 = vmatpush.bf16.xpose.msra.mxu0 0
    %709 = vmatpush.bf16.xpose.msra.mxu0 0
    %710 = vmatpush.bf16.xpose.msra.mxu0 0
    %711 = vmatpush.bf16.xpose.msra.mxu0 0
    %712 = vmatpush.bf16.xpose.msra.mxu0 0
    %713 = vmatpush.bf16.xpose.msra.mxu0 0
    %714 = vmatpush.bf16.xpose.msra.mxu0 %v697
    %715 = vmatmul.bf16.gmra.mxu0 %v703
    %v716 = vpop.f32.mrf.mxu0
    %v717 = vadd.f32 %v700, %v716
    %v718 = vpop.f32.mrf.mxu0
    %719 = vdwg.mxu0
    %720 = vmatpush.bf16.xpose.msra.mxu0 0
    %721 = vmatpush.bf16.xpose.msra.mxu0 0
    %722 = vmatpush.bf16.xpose.msra.mxu0 0
    %723 = vmatpush.bf16.xpose.msra.mxu0 0
    %724 = vmatpush.bf16.xpose.msra.mxu0 0
    %725 = vmatpush.bf16.xpose.msra.mxu0 0
    %726 = vmatpush.bf16.xpose.msra.mxu0 0
    %727 = vmatpush.bf16.xpose.msra.mxu0 %v698
    %728 = vmatmul.bf16.gmra.mxu0 %v704
    %v729 = vpop.f32.mrf.mxu0
    %v730 = vadd.f32 %v717, %v729
    %v731 = vpop.f32.mrf.mxu0
    %732 = vdwg.mxu0
    %vm733 = vcmask 57344
    %734 = vst.msk [vmem:[#allocation12] sm:$0x1] %vm733, %v730
    // Predicated region
    $region62: #{tpu_custom_call.1} parent=1 // pred_check
      _
    $region63: #{tpu_custom_call.1} parent=1 // pred_check_branch
      %736 = sbr.rel (0) target = $region65
    $region64: #{tpu_custom_call.1} parent=1 // pred_region
      %738 = vsyncadd [#allocation6], 0
      %s740 = sshll.u32 [#allocation12], 4
      %s741 = int_to_ptr.vmem [resolvable:$true] %s740
      %s742 = sshll.u32 %s11, 4
      %s743 = int_to_ptr.hbm [resolvable:$true] %s742
      %745 = dma.vmem_to_hbm [thread:$0]  %s741, 16, %s743, [#allocation6]
    $region65: #{tpu_custom_call.1} parent=1 // pred_fallthru
      _
    // Predicated region
    $region66: #{tpu_custom_call.1} parent=1 // pred_check
      _
    $region67: #{tpu_custom_call.1} parent=1 // pred_check_branch
      %747 = sbr.rel (0) target = $region69
    $region68: #{tpu_custom_call.1} parent=1 // pred_region
      %749 = dma.done [#allocation6], 16
    $region69: #{tpu_custom_call.1} parent=1 // pred_fallthru
      _
    %750 = vsyncpa [#allocation5], 1
    %751 = vsyncpa [#allocation8], 1
    %752 = vsyncpa [#allocation11], 1
    %753 = vsyncpa [#allocation6], 1

</llo_original>
